<compile_context>
chip_gen: v6e
topology: v6e:2x2x1
jax: 0.10.0
libtpu: 0.0.40
codegen_flags: <defaults>
</compile_context>

<pallas_src>
import functools

import jax
import jax.numpy as jnp
from jax import lax
from jax.experimental import pallas as pl
from jax.experimental.pallas import tpu as pltpu


_VMEM_LIMIT_BYTES = 32 * 1024 * 1024   # scoped-VMEM raise; safe on v5e/v6e/v7x
_VMEM_PLAN_BUDGET = 24 * 1024 * 1024   # planning budget (conservative for v7x 64 MiB)


def _compiler_params(semantics):
    return pltpu.CompilerParams(dimension_semantics=semantics,
                                vmem_limit_bytes=_VMEM_LIMIT_BYTES)


# ----------------------------- in-kernel helpers -----------------------------

def _conv_core(x_ref, w_ref, *, NB, H, WC, KH, ph, Hout, mxu_dtype):
    """Banded-matmul convolution for one batch block.

    x_ref : (NB, H, W*Cin)            lane-dense activation rows (f32)
    w_ref : (KH, W*Cin, Wout*Cout)    banded weights (W padding folded into zeros)
    returns a (NB*Hout, Wout*Cout) f32 accumulator, lane index = x*Cout + co.

    Only the H padding is materialized (a cheap zero-row concat in VMEM); the
    padded W columns would multiply structural zeros, so their rows were simply
    dropped from the banded weight.  Each dy is one MXU push whose LHS is a
    plain row-shifted view - no per-tap lane relayout.
    """
    x = x_ref[...]                                      # (NB, H, WC) f32
    if ph:
        z = jnp.zeros((NB, ph, WC), x.dtype)
        x = jnp.concatenate([z, x, z], axis=1)          # (NB, H + 2*ph, WC)
    x = x.astype(mxu_dtype)                             # bf16 operands on v6e/v7x
    acc = None
    for dy in range(KH):                                # KH static, small
        lhs = x[:, dy:dy + Hout, :].reshape(NB * Hout, WC)
        d = jnp.dot(lhs, w_ref[dy], preferred_element_type=jnp.float32)
        acc = d if acc is None else acc + d
    return acc


def _sum_lane_groups(row, Wout, Cout):
    """(1, Wout*Cout) -> (1, Cout): reduce the Wout lane groups (lane = x*Cout + c).

    Static contiguous lane slices; avoids a lane->sublane relayout reshape.
    """
    tot = row[:, 0:Cout]
    for x in range(1, Wout):
        tot = tot + row[:, x * Cout:(x + 1) * Cout]
    return tot


# --------------------------------- kernels -----------------------------------

def _conv_bias_kernel(x_ref, w_ref, b_ref, o_ref, *,
                      NB, H, WC, KH, ph, Hout, NWC, mxu_dtype):
    """bn=False path: conv + bias (bias pre-tiled lane-dense in the wrapper)."""
    acc = _conv_core(x_ref, w_ref, NB=NB, H=H, WC=WC, KH=KH, ph=ph,
                     Hout=Hout, mxu_dtype=mxu_dtype)
    acc = acc + b_ref[...]                              # (1, Wout*Cout)
    o_ref[...] = acc.reshape(NB, Hout, NWC).astype(o_ref.dtype)


def _conv_bn_fused_kernel(x_ref, w_ref, gamma_ref, beta_ref, o_ref, stats_ref, *,
                          NB, H, WC, KH, ph, Hout, Wout, Cout, NWC,
                          count, eps, mxu_dtype):
    """Conv + train-mode BatchNorm in ONE pass over HBM.

    The whole activation stays resident in the constant-index output block;
    per-channel sum / sum-of-squares accumulate in a VMEM scratch; the final
    grid step computes scale/shift once and normalizes the resident block in
    place, so the activation is written to HBM exactly once and never re-read.
    """
    i = pl.program_id(0)
    acc = _conv_core(x_ref, w_ref, NB=NB, H=H, WC=WC, KH=KH, ph=ph,
                     Hout=Hout, mxu_dtype=mxu_dtype)
    o_ref[pl.ds(i * NB, NB), :, :] = acc.reshape(NB, Hout, NWC).astype(o_ref.dtype)

    s = _sum_lane_groups(jnp.sum(acc, axis=0, keepdims=True), Wout, Cout)
    sq = _sum_lane_groups(jnp.sum(acc * acc, axis=0, keepdims=True), Wout, Cout)
    part = jnp.concatenate([s, sq], axis=0)             # (2, Cout) f32

    @pl.when(i == 0)
    def _():
        stats_ref[...] = jnp.zeros_like(stats_ref)

    stats_ref[...] = stats_ref[...] + part

    @pl.when(i == pl.num_programs(0) - 1)
    def _():
        st = stats_ref[...]
        inv_n = 1.0 / count
        mean = st[0:1, :] * inv_n                       # (1, Cout)
        var = st[1:2, :] * inv_n - mean * mean          # biased variance (train mode)
        scale = gamma_ref[...] * lax.rsqrt(var + eps)
        shift = beta_ref[...] - mean * scale
        scale_r = jnp.tile(scale, (1, Wout))            # computed ONCE, not per step
        shift_r = jnp.tile(shift, (1, Wout))
        o_ref[...] = (o_ref[...] * scale_r + shift_r).astype(o_ref.dtype)


def _conv_stats_kernel(x_ref, w_ref, h_ref, stats_ref, *,
                       NB, H, WC, KH, ph, Hout, Wout, Cout, NWC, mxu_dtype):
    """Fallback first pass (activation too large for VMEM residency)."""
    acc = _conv_core(x_ref, w_ref, NB=NB, H=H, WC=WC, KH=KH, ph=ph,
                     Hout=Hout, mxu_dtype=mxu_dtype)
    h_ref[...] = acc.reshape(NB, Hout, NWC).astype(h_ref.dtype)
    s = _sum_lane_groups(jnp.sum(acc, axis=0, keepdims=True), Wout, Cout)
    sq = _sum_lane_groups(jnp.sum(acc * acc, axis=0, keepdims=True), Wout, Cout)
    stats_ref[0] = jnp.concatenate([s, sq], axis=0)     # per-block partial stats


def _bn_apply_kernel(h_ref, scale_ref, shift_ref, o_ref):
    """Fallback second pass: y = h*scale + shift, scale/shift precomputed lane-dense."""
    o_ref[...] = (h_ref[...] * scale_ref[...] + shift_ref[...]).astype(o_ref.dtype)


# ------------------------------ pallas_call glue ------------------------------

def _conv_bias_call(x_rows, w_band, bias_r, *, NB, ph, Hout, mxu_dtype):
    N, H, WC = x_rows.shape
    KH, _, NWC = w_band.shape
    grid = (N // NB,)
    kern = functools.partial(_conv_bias_kernel, NB=NB, H=H, WC=WC, KH=KH, ph=ph,
                             Hout=Hout, NWC=NWC, mxu_dtype=mxu_dtype)
    cost = pl.CostEstimate(
        flops=2 * N * Hout * WC * NWC * KH, transcendentals=0,
        bytes_accessed=x_rows.nbytes + grid[0] * w_band.nbytes
        + N * Hout * NWC * x_rows.dtype.itemsize + bias_r.nbytes)
    return pl.pallas_call(
        kern,
        out_shape=jax.ShapeDtypeStruct((N, Hout, NWC), x_rows.dtype),
        grid_spec=pltpu.PrefetchScalarGridSpec(
            num_scalar_prefetch=0,
            grid=grid,
            in_specs=[
                pl.BlockSpec((NB, H, WC), lambda i: (i, 0, 0)),
                pl.BlockSpec((KH, WC, NWC), lambda i: (0, 0, 0)),
                pl.BlockSpec((1, NWC), lambda i: (0, 0)),
            ],
            out_specs=pl.BlockSpec((NB, Hout, NWC), lambda i: (i, 0, 0))),
        compiler_params=_compiler_params(("parallel",)),
        cost_estimate=cost,
    )(x_rows, w_band, bias_r)


def _conv_bn_fused_call(x_rows, w_band, gamma, beta, *, NB, ph, Hout, Wout, Cout,
                        eps, mxu_dtype):
    N, H, WC = x_rows.shape
    KH, _, NWC = w_band.shape
    grid = (N // NB,)
    count = float(N * Hout * Wout)
    kern = functools.partial(_conv_bn_fused_kernel, NB=NB, H=H, WC=WC, KH=KH,
                             ph=ph, Hout=Hout, Wout=Wout, Cout=Cout, NWC=NWC,
                             count=count, eps=eps, mxu_dtype=mxu_dtype)
    cost = pl.CostEstimate(
        flops=2 * N * Hout * WC * NWC * KH + 6 * N * Hout * NWC,
        transcendentals=Cout,
        bytes_accessed=x_rows.nbytes + grid[0] * w_band.nbytes
        + N * Hout * NWC * x_rows.dtype.itemsize)
    return pl.pallas_call(
        kern,
        out_shape=jax.ShapeDtypeStruct((N, Hout, NWC), x_rows.dtype),
        grid_spec=pltpu.PrefetchScalarGridSpec(
            num_scalar_prefetch=0,
            grid=grid,
            in_specs=[
                pl.BlockSpec((NB, H, WC), lambda i: (i, 0, 0)),
                pl.BlockSpec((KH, WC, NWC), lambda i: (0, 0, 0)),
                pl.BlockSpec((1, Cout), lambda i: (0, 0)),
                pl.BlockSpec((1, Cout), lambda i: (0, 0)),
            ],
            # Constant-index full-size output block => resident in VMEM across
            # the grid, written back to HBM exactly once at the end.
            out_specs=pl.BlockSpec((N, Hout, NWC), lambda i: (0, 0, 0)),
            scratch_shapes=[pltpu.VMEM((2, Cout), jnp.float32)]),
        compiler_params=_compiler_params(("arbitrary",)),   # sequential stats carry
        cost_estimate=cost,
    )(x_rows, w_band, gamma, beta)


def _conv_stats_call(x_rows, w_band, *, NB, ph, Hout, Wout, Cout, mxu_dtype):
    N, H, WC = x_rows.shape
    KH, _, NWC = w_band.shape
    grid = (N // NB,)
    kern = functools.partial(_conv_stats_kernel, NB=NB, H=H, WC=WC, KH=KH, ph=ph,
                             Hout=Hout, Wout=Wout, Cout=Cout, NWC=NWC,
                             mxu_dtype=mxu_dtype)
    cost = pl.CostEstimate(
        flops=2 * N * Hout * WC * NWC * KH + 4 * N * Hout * NWC,
        transcendentals=0,
        bytes_accessed=x_rows.nbytes + grid[0] * w_band.nbytes
        + N * Hout * NWC * x_rows.dtype.itemsize)
    return pl.pallas_call(
        kern,
        out_shape=(jax.ShapeDtypeStruct((N, Hout, NWC), x_rows.dtype),
                   jax.ShapeDtypeStruct((grid[0], 2, Cout), jnp.float32)),
        grid_spec=pltpu.PrefetchScalarGridSpec(
            num_scalar_prefetch=0,
            grid=grid,
            in_specs=[
                pl.BlockSpec((NB, H, WC), lambda i: (i, 0, 0)),
                pl.BlockSpec((KH, WC, NWC), lambda i: (0, 0, 0)),
            ],
            out_specs=(pl.BlockSpec((NB, Hout, NWC), lambda i: (i, 0, 0)),
                       pl.BlockSpec((1, 2, Cout), lambda i: (i, 0, 0)))),
        compiler_params=_compiler_params(("parallel",)),
        cost_estimate=cost,
    )(x_rows, w_band)


def _bn_apply_call(h_flat, scale_r, shift_r, *, NB):
    N, Hout, NWC = h_flat.shape
    grid = (N // NB,)
    cost = pl.CostEstimate(
        flops=2 * h_flat.size, transcendentals=0,
        bytes_accessed=2 * h_flat.nbytes + scale_r.nbytes + shift_r.nbytes)
    return pl.pallas_call(
        _bn_apply_kernel,
        out_shape=jax.ShapeDtypeStruct(h_flat.shape, h_flat.dtype),
        grid_spec=pltpu.PrefetchScalarGridSpec(
            num_scalar_prefetch=0,
            grid=grid,
            in_specs=[
                pl.BlockSpec((NB, Hout, NWC), lambda i: (i, 0, 0)),
                pl.BlockSpec((1, NWC), lambda i: (0, 0)),
                pl.BlockSpec((1, NWC), lambda i: (0, 0)),
            ],
            out_specs=pl.BlockSpec((NB, Hout, NWC), lambda i: (i, 0, 0))),
        compiler_params=_compiler_params(("parallel",)),
        cost_estimate=cost,
    )(h_flat, scale_r, shift_r)


# ------------------------------- Module glue ---------------------------------

class BasicConv2dPallas:
    """Pallas port of BasicConv2d(input_dim, output_dim, kernel_size, bn).

    Forward semantics match the PyTorch module in training mode:
      y = conv2d(x, padding=kernel_size//2) (+ bias);  y = BatchNorm2d(y) if bn.

    mxu_dtype   : MXU operand dtype (bf16 by default - native on v6e/v7x; the
                  accumulation and BN statistics stay f32).
    batch_block : images per grid step (None = auto against a VMEM budget).
    fuse_bn     : allow the single-pass conv+BN kernel when the whole activation
                  fits the VMEM budget; otherwise a two-pass scheme is used.
    """

    def __init__(self, input_dim, output_dim, kernel_size, bn, key, *,
                 mxu_dtype=jnp.bfloat16, batch_block=None, fuse_bn=True):
        self.input_dim = int(input_dim)
        self.output_dim = int(output_dim)
        self.kernel_size = tuple(kernel_size)
        self.bn = bool(bn)
        self.eps = 1e-5
        self.mxu_dtype = mxu_dtype
        self.batch_block = batch_block
        self.fuse_bn = fuse_bn

        KH, KW = self.kernel_size
        kw_key, kb_key = jax.random.split(key)
        fan_in = input_dim * KH * KW
        bound = fan_in ** -0.5                       # PyTorch default conv init
        self.w_hwio = jax.random.uniform(
            kw_key, (KH, KW, input_dim, output_dim), jnp.float32, -bound, bound)
        self.b = jax.random.uniform(
            kb_key, (1, output_dim), jnp.float32, -bound, bound)
        self.gamma = jnp.ones((1, output_dim), jnp.float32)   # BatchNorm2d affine init
        self.beta = jnp.zeros((1, output_dim), jnp.float32)
        # TODO(synk): BatchNorm2d's running_mean/var update (training-state side
        # effect) is not modelled; it does not affect the forward output.

    # Banded weight: the conv becomes KH matmuls over lane-dense (H, W*Cin) rows.
    # W padding is implicit (padded columns would only hit structural zeros).
    def _banded_weight(self, W, Wout):
        KH, KW = self.kernel_size
        Cin, Cout = self.input_dim, self.output_dim
        pw = KW // 2
        dx = jnp.arange(W)[:, None] - jnp.arange(Wout)[None, :] + pw     # (W, Wout)
        valid = (dx >= 0) & (dx < KW)
        band = jnp.take(self.w_hwio, jnp.clip(dx, 0, KW - 1), axis=1)    # (KH,W,Wout,Cin,Cout)
        band = band * valid[None, :, :, None, None].astype(band.dtype)
        band = jnp.transpose(band, (0, 1, 3, 2, 4))                      # (KH,W,Cin,Wout,Cout)
        return band.reshape(KH, W * Cin, Wout * Cout).astype(self.mxu_dtype)

    def _plan(self, N, H, WC, Hout, NWC, w_band_bytes):
        """Pick the batch block; decide whether the fused single pass fits VMEM."""
        f32 = 4

        def step_bytes(nb):
            return (2 * nb * H * WC * f32              # double-buffered input blocks
                    + nb * (H + 2) * WC * f32          # padded copy + bf16 cast
                    + nb * Hout * NWC * f32            # f32 accumulator
                    + 2 * nb * Hout * NWC * f32        # (worst case) output blocks
                    + 2 * w_band_bytes)                # weights

        if self.batch_block is not None:
            assert N % self.batch_block == 0
            nb = self.batch_block
        else:
            nb = 1
            for d in range(2, min(N, 8) + 1):          # amortize ~0.35us/step overhead
                if N % d == 0 and step_bytes(d) <= _VMEM_PLAN_BUDGET:
                    nb = d
        act_bytes = N * Hout * NWC * f32
        fused = self.bn and self.fuse_bn and (
            act_bytes + step_bytes(nb) <= _VMEM_PLAN_BUDGET)
        # TODO(synk): for large feature maps (banded weight or activation past the
        # budget) switch to an Hout row-strip grid with a KH-1 halo and an im2col
        # formulation, re-budgeted against v7x's 64 MiB VMEM.
        return nb, fused

    def __call__(self, x_nchw):
        N, Cin, H, W = x_nchw.shape
        assert Cin == self.input_dim
        KH, KW = self.kernel_size
        Cout = self.output_dim
        ph, pw = KH // 2, KW // 2
        Hout = H + 2 * ph - KH + 1
        Wout = W + 2 * pw - KW + 1
        WC, NWC = W * Cin, Wout * Cout

        # NCHW -> lane-dense (N, H, W*Cin) rows: full-width DMAs and vector ops
        # instead of a Cin-wide minor dim padded to 128 lanes.
        # TODO(synk): when chained inside a network, keep activations in this
        # lane-dense layout end-to-end and drop the NCHW<->NHWC transposes.
        x_rows = jnp.transpose(x_nchw, (0, 2, 3, 1)).reshape(N, H, WC)

        w_band = self._banded_weight(W, Wout)
        NB, fused = self._plan(N, H, WC, Hout, NWC, w_band.nbytes)

        if not self.bn:
            bias_r = jnp.tile(self.b, (1, Wout))       # lane-dense bias (hoisted)
            y_flat = _conv_bias_call(x_rows, w_band, bias_r, NB=NB, ph=ph,
                                     Hout=Hout, mxu_dtype=self.mxu_dtype)
        elif fused:
            # Single pass: conv + stats + normalization.  The conv bias is dropped
            # because it cancels exactly against the train-mode BN mean.
            y_flat = _conv_bn_fused_call(x_rows, w_band, self.gamma, self.beta,
                                         NB=NB, ph=ph, Hout=Hout, Wout=Wout,
                                         Cout=Cout, eps=self.eps,
                                         mxu_dtype=self.mxu_dtype)
        else:
            # Two-pass fallback: conv + per-block stats, then one hoisted
            # scale/shift computed once in plain JAX on a (2, Cout) tensor.
            h_flat, stats = _conv_stats_call(x_rows, w_band, NB=NB, ph=ph,
                                             Hout=Hout, Wout=Wout, Cout=Cout,
                                             mxu_dtype=self.mxu_dtype)
            st = jnp.sum(stats, axis=0)                # (2, Cout), tiny
            count = float(N * Hout * Wout)
            mean = st[0] / count
            var = st[1] / count - mean * mean
            scale = self.gamma[0] * lax.rsqrt(var + self.eps)
            shift = self.beta[0] - mean * scale
            scale_r = jnp.tile(scale[None, :], (1, Wout))   # lane-dense (1, Wout*Cout)
            shift_r = jnp.tile(shift[None, :], (1, Wout))
            y_flat = _bn_apply_call(h_flat, scale_r, shift_r, NB=NB)

        y = y_flat.reshape(N, Hout, Wout, Cout)        # free row-major un-flatten
        return jnp.transpose(y, (0, 3, 1, 2))          # back to NCHW


# ----------------------------------- main -------------------------------------

if __name__ == "__main__":
    key = jax.random.PRNGKey(0)
    k_x, k_p = jax.random.split(key)

    N, Cin, H, W = 4, 4, 16, 16          # small; N=4 exercises the batch-blocked grid
    Cout = 8
    kernel_size = (3, 3)
    ph, pw = kernel_size[0] // 2, kernel_size[1] // 2

    x = jax.random.normal(k_x, (N, Cin, H, W), jnp.float32)     # NCHW like PyTorch
    x_nhwc = jnp.transpose(x, (0, 2, 3, 1))

    # Module variants (same key => identical parameters).
    mods = {
        "bn_fused_f32": BasicConv2dPallas(Cin, Cout, kernel_size, bn=True, key=k_p,
                                          mxu_dtype=jnp.float32),
        "bn_fused_bf16": BasicConv2dPallas(Cin, Cout, kernel_size, bn=True, key=k_p,
                                           batch_block=2),
        "bn_twopass_bf16": BasicConv2dPallas(Cin, Cout, kernel_size, bn=True, key=k_p,
                                             batch_block=2, fuse_bn=False),
        "conv_bias_bf16": BasicConv2dPallas(Cin, Cout, kernel_size, bn=False, key=k_p),
    }

    # References (plain XLA, f32, NHWC).
    m0 = mods["bn_fused_f32"]
    conv_ref = lax.conv_general_dilated(
        x_nhwc, m0.w_hwio, window_strides=(1, 1),
        padding=((ph, ph), (pw, pw)),
        dimension_numbers=("NHWC", "HWIO", "NHWC")) + m0.b.reshape(-1)
    mean = jnp.mean(conv_ref, axis=(0, 1, 2), keepdims=True)
    var = jnp.mean((conv_ref - mean) ** 2, axis=(0, 1, 2), keepdims=True)
    bn_ref = ((conv_ref - mean) * lax.rsqrt(var + 1e-5) * m0.gamma.reshape(-1)
              + m0.beta.reshape(-1))

    refs = {"bn_fused_f32": bn_ref, "bn_fused_bf16": bn_ref,
            "bn_twopass_bf16": bn_ref, "conv_bias_bf16": conv_ref}
    tols = {"bn_fused_f32": 1e-3,        # f32 MXU anchor: tight formulation check
            "bn_fused_bf16": 6e-2,       # bf16 MXU operands, f32 accumulation
            "bn_twopass_bf16": 6e-2,
            "conv_bias_bf16": 5e-2}

    for name, mod in mods.items():
        out = jax.block_until_ready(mod(x))
        ref = jnp.transpose(refs[name], (0, 3, 1, 2))
        assert out.shape == (N, Cout, H, W), (name, out.shape)
        err = float(jnp.max(jnp.abs(out - ref)))
        assert err < tols[name], (name, err)

    print("KERNEL_OK")
</pallas_src>

<mosaic_0001>
module attributes {stable_mosaic.version = 11 : i64} {
  func.func @_conv_bn_fused_kernel(%arg0: i32, %arg1: memref<4x16x64xf32, #tpu.memory_space<vmem>>, %arg2: memref<3x64x128xf32, #tpu.memory_space<vmem>>, %arg3: memref<1x8xf32, #tpu.memory_space<vmem>>, %arg4: memref<1x8xf32, #tpu.memory_space<vmem>>, %arg5: memref<4x16x128xf32, #tpu.memory_space<vmem>>, %arg6: memref<2x8xf32, #tpu.memory_space<vmem>>) attributes {dimension_semantics = [#tpu.dimension_semantics<arbitrary>], iteration_bounds = array<i64: 1>, scalar_prefetch = 0 : i64, scratch_operands = 1 : i64, tpu.core_type = #tpu.core_type<tc>, window_params = [{transform_indices = @transform_0, window_bounds = array<i64: 4, 16, 64>}, {pipeline_mode = #tpu.pipeline_mode<synchronous>, transform_indices = @transform_1, window_bounds = array<i64: 3, 64, 128>}, {pipeline_mode = #tpu.pipeline_mode<synchronous>, transform_indices = @transform_2, window_bounds = array<i64: 1, 8>}, {pipeline_mode = #tpu.pipeline_mode<synchronous>, transform_indices = @transform_3, window_bounds = array<i64: 1, 8>}, {pipeline_mode = #tpu.pipeline_mode<synchronous>, transform_indices = @transform_4, window_bounds = array<i64: 4, 16, 128>}]} {
    %c0 = arith.constant 0 : index
    %c0_0 = arith.constant 0 : index
    %c0_1 = arith.constant 0 : index
    %0 = vector.load %arg1[%c0, %c0_0, %c0_1] : memref<4x16x64xf32, #tpu.memory_space<vmem>>, vector<4x16x64xf32>
    %cst = arith.constant 0.000000e+00 : f32
    %1 = vector.broadcast %cst : f32 to vector<4x1x64xf32>
    %2 = tpu.concatenate %1, %0, %1 in 1 : vector<4x1x64xf32>, vector<4x16x64xf32>, vector<4x1x64xf32> -> vector<4x18x64xf32>
    %3 = vector.extract_strided_slice %2 {offsets = [0, 0, 0], sizes = [4, 16, 64], strides = [1, 1, 1]} : vector<4x18x64xf32> to vector<4x16x64xf32>
    %4 = vector.shape_cast %3 : vector<4x16x64xf32> to vector<64x64xf32>
    %c0_2 = arith.constant 0 : index
    %c0_3 = arith.constant 0 : index
    %c0_4 = arith.constant 0 : index
    %5 = vector.load %arg2[%c0_2, %c0_3, %c0_4] : memref<3x64x128xf32, #tpu.memory_space<vmem>>, vector<1x64x128xf32>
    %6 = vector.shape_cast %5 : vector<1x64x128xf32> to vector<64x128xf32>
    %cst_5 = arith.constant dense<0.000000e+00> : vector<64x128xf32>
    %7 = tpu.matmul %4, %6, %cst_5 {dimension_numbers = #tpu.dot_dimension_numbers<[1], [0], [0], [1], [0, 0, 1, 1], [], []>} : vector<64x64xf32>, vector<64x128xf32>, vector<64x128xf32> -> vector<64x128xf32>
    %8 = vector.extract_strided_slice %2 {offsets = [0, 1, 0], sizes = [4, 16, 64], strides = [1, 1, 1]} : vector<4x18x64xf32> to vector<4x16x64xf32>
    %9 = vector.shape_cast %8 : vector<4x16x64xf32> to vector<64x64xf32>
    %c1 = arith.constant 1 : index
    %c0_6 = arith.constant 0 : index
    %c0_7 = arith.constant 0 : index
    %10 = vector.load %arg2[%c1, %c0_6, %c0_7] : memref<3x64x128xf32, #tpu.memory_space<vmem>>, vector<1x64x128xf32>
    %11 = vector.shape_cast %10 : vector<1x64x128xf32> to vector<64x128xf32>
    %cst_8 = arith.constant dense<0.000000e+00> : vector<64x128xf32>
    %12 = tpu.matmul %9, %11, %cst_8 {dimension_numbers = #tpu.dot_dimension_numbers<[1], [0], [0], [1], [0, 0, 1, 1], [], []>} : vector<64x64xf32>, vector<64x128xf32>, vector<64x128xf32> -> vector<64x128xf32>
    %13 = arith.addf %7, %12 : vector<64x128xf32>
    %14 = vector.extract_strided_slice %2 {offsets = [0, 2, 0], sizes = [4, 16, 64], strides = [1, 1, 1]} : vector<4x18x64xf32> to vector<4x16x64xf32>
    %15 = vector.shape_cast %14 : vector<4x16x64xf32> to vector<64x64xf32>
    %c2 = arith.constant 2 : index
    %c0_9 = arith.constant 0 : index
    %c0_10 = arith.constant 0 : index
    %16 = vector.load %arg2[%c2, %c0_9, %c0_10] : memref<3x64x128xf32, #tpu.memory_space<vmem>>, vector<1x64x128xf32>
    %17 = vector.shape_cast %16 : vector<1x64x128xf32> to vector<64x128xf32>
    %cst_11 = arith.constant dense<0.000000e+00> : vector<64x128xf32>
    %18 = tpu.matmul %15, %17, %cst_11 {dimension_numbers = #tpu.dot_dimension_numbers<[1], [0], [0], [1], [0, 0, 1, 1], [], []>} : vector<64x64xf32>, vector<64x128xf32>, vector<64x128xf32> -> vector<64x128xf32>
    %19 = arith.addf %13, %18 : vector<64x128xf32>
    %20 = vector.shape_cast %19 : vector<64x128xf32> to vector<4x16x128xf32>
    %c4_i32 = arith.constant 4 : i32
    %21 = arith.muli %arg0, %c4_i32 : i32
    %22 = arith.index_cast %21 : i32 to index
    %c0_12 = arith.constant 0 : index
    %c0_13 = arith.constant 0 : index
    %23 = vector.load %arg5[%22, %c0_12, %c0_13] : memref<4x16x128xf32, #tpu.memory_space<vmem>>, vector<4x16x128xf32>
    tpu.vector_store %arg5[%22, %c0_12, %c0_13], %20 {strides = array<i32>} : memref<4x16x128xf32, #tpu.memory_space<vmem>>, vector<4x16x128xf32>,
    %cst_14 = arith.constant dense<0.000000e+00> : vector<128xf32>
    %24 = vector.multi_reduction <add>, %19, %cst_14 [0] : vector<64x128xf32> to vector<128xf32>
    %25 = vector.shape_cast %24 : vector<128xf32> to vector<1x128xf32>
    %26 = vector.extract_strided_slice %25 {offsets = [0, 0], sizes = [1, 8], strides = [1, 1]} : vector<1x128xf32> to vector<1x8xf32>
    %27 = vector.extract_strided_slice %25 {offsets = [0, 8], sizes = [1, 8], strides = [1, 1]} : vector<1x128xf32> to vector<1x8xf32>
    %28 = arith.addf %26, %27 : vector<1x8xf32>
    %29 = vector.extract_strided_slice %25 {offsets = [0, 16], sizes = [1, 8], strides = [1, 1]} : vector<1x128xf32> to vector<1x8xf32>
    %30 = arith.addf %28, %29 : vector<1x8xf32>
    %31 = vector.extract_strided_slice %25 {offsets = [0, 24], sizes = [1, 8], strides = [1, 1]} : vector<1x128xf32> to vector<1x8xf32>
    %32 = arith.addf %30, %31 : vector<1x8xf32>
    %33 = vector.extract_strided_slice %25 {offsets = [0, 32], sizes = [1, 8], strides = [1, 1]} : vector<1x128xf32> to vector<1x8xf32>
    %34 = arith.addf %32, %33 : vector<1x8xf32>
    %35 = vector.extract_strided_slice %25 {offsets = [0, 40], sizes = [1, 8], strides = [1, 1]} : vector<1x128xf32> to vector<1x8xf32>
    %36 = arith.addf %34, %35 : vector<1x8xf32>
    %37 = vector.extract_strided_slice %25 {offsets = [0, 48], sizes = [1, 8], strides = [1, 1]} : vector<1x128xf32> to vector<1x8xf32>
    %38 = arith.addf %36, %37 : vector<1x8xf32>
    %39 = vector.extract_strided_slice %25 {offsets = [0, 56], sizes = [1, 8], strides = [1, 1]} : vector<1x128xf32> to vector<1x8xf32>
    %40 = arith.addf %38, %39 : vector<1x8xf32>
    %41 = vector.extract_strided_slice %25 {offsets = [0, 64], sizes = [1, 8], strides = [1, 1]} : vector<1x128xf32> to vector<1x8xf32>
    %42 = arith.addf %40, %41 : vector<1x8xf32>
    %43 = vector.extract_strided_slice %25 {offsets = [0, 72], sizes = [1, 8], strides = [1, 1]} : vector<1x128xf32> to vector<1x8xf32>
    %44 = arith.addf %42, %43 : vector<1x8xf32>
    %45 = vector.extract_strided_slice %25 {offsets = [0, 80], sizes = [1, 8], strides = [1, 1]} : vector<1x128xf32> to vector<1x8xf32>
    %46 = arith.addf %44, %45 : vector<1x8xf32>
    %47 = vector.extract_strided_slice %25 {offsets = [0, 88], sizes = [1, 8], strides = [1, 1]} : vector<1x128xf32> to vector<1x8xf32>
    %48 = arith.addf %46, %47 : vector<1x8xf32>
    %49 = vector.extract_strided_slice %25 {offsets = [0, 96], sizes = [1, 8], strides = [1, 1]} : vector<1x128xf32> to vector<1x8xf32>
    %50 = arith.addf %48, %49 : vector<1x8xf32>
    %51 = vector.extract_strided_slice %25 {offsets = [0, 104], sizes = [1, 8], strides = [1, 1]} : vector<1x128xf32> to vector<1x8xf32>
    %52 = arith.addf %50, %51 : vector<1x8xf32>
    %53 = vector.extract_strided_slice %25 {offsets = [0, 112], sizes = [1, 8], strides = [1, 1]} : vector<1x128xf32> to vector<1x8xf32>
    %54 = arith.addf %52, %53 : vector<1x8xf32>
    %55 = vector.extract_strided_slice %25 {offsets = [0, 120], sizes = [1, 8], strides = [1, 1]} : vector<1x128xf32> to vector<1x8xf32>
    %56 = arith.addf %54, %55 : vector<1x8xf32>
    %57 = arith.mulf %19, %19 : vector<64x128xf32>
    %cst_15 = arith.constant dense<0.000000e+00> : vector<128xf32>
    %58 = vector.multi_reduction <add>, %57, %cst_15 [0] : vector<64x128xf32> to vector<128xf32>
    %59 = vector.shape_cast %58 : vector<128xf32> to vector<1x128xf32>
    %60 = vector.extract_strided_slice %59 {offsets = [0, 0], sizes = [1, 8], strides = [1, 1]} : vector<1x128xf32> to vector<1x8xf32>
    %61 = vector.extract_strided_slice %59 {offsets = [0, 8], sizes = [1, 8], strides = [1, 1]} : vector<1x128xf32> to vector<1x8xf32>
    %62 = arith.addf %60, %61 : vector<1x8xf32>
    %63 = vector.extract_strided_slice %59 {offsets = [0, 16], sizes = [1, 8], strides = [1, 1]} : vector<1x128xf32> to vector<1x8xf32>
    %64 = arith.addf %62, %63 : vector<1x8xf32>
    %65 = vector.extract_strided_slice %59 {offsets = [0, 24], sizes = [1, 8], strides = [1, 1]} : vector<1x128xf32> to vector<1x8xf32>
    %66 = arith.addf %64, %65 : vector<1x8xf32>
    %67 = vector.extract_strided_slice %59 {offsets = [0, 32], sizes = [1, 8], strides = [1, 1]} : vector<1x128xf32> to vector<1x8xf32>
    %68 = arith.addf %66, %67 : vector<1x8xf32>
    %69 = vector.extract_strided_slice %59 {offsets = [0, 40], sizes = [1, 8], strides = [1, 1]} : vector<1x128xf32> to vector<1x8xf32>
    %70 = arith.addf %68, %69 : vector<1x8xf32>
    %71 = vector.extract_strided_slice %59 {offsets = [0, 48], sizes = [1, 8], strides = [1, 1]} : vector<1x128xf32> to vector<1x8xf32>
    %72 = arith.addf %70, %71 : vector<1x8xf32>
    %73 = vector.extract_strided_slice %59 {offsets = [0, 56], sizes = [1, 8], strides = [1, 1]} : vector<1x128xf32> to vector<1x8xf32>
    %74 = arith.addf %72, %73 : vector<1x8xf32>
    %75 = vector.extract_strided_slice %59 {offsets = [0, 64], sizes = [1, 8], strides = [1, 1]} : vector<1x128xf32> to vector<1x8xf32>
    %76 = arith.addf %74, %75 : vector<1x8xf32>
    %77 = vector.extract_strided_slice %59 {offsets = [0, 72], sizes = [1, 8], strides = [1, 1]} : vector<1x128xf32> to vector<1x8xf32>
    %78 = arith.addf %76, %77 : vector<1x8xf32>
    %79 = vector.extract_strided_slice %59 {offsets = [0, 80], sizes = [1, 8], strides = [1, 1]} : vector<1x128xf32> to vector<1x8xf32>
    %80 = arith.addf %78, %79 : vector<1x8xf32>
    %81 = vector.extract_strided_slice %59 {offsets = [0, 88], sizes = [1, 8], strides = [1, 1]} : vector<1x128xf32> to vector<1x8xf32>
    %82 = arith.addf %80, %81 : vector<1x8xf32>
    %83 = vector.extract_strided_slice %59 {offsets = [0, 96], sizes = [1, 8], strides = [1, 1]} : vector<1x128xf32> to vector<1x8xf32>
    %84 = arith.addf %82, %83 : vector<1x8xf32>
    %85 = vector.extract_strided_slice %59 {offsets = [0, 104], sizes = [1, 8], strides = [1, 1]} : vector<1x128xf32> to vector<1x8xf32>
    %86 = arith.addf %84, %85 : vector<1x8xf32>
    %87 = vector.extract_strided_slice %59 {offsets = [0, 112], sizes = [1, 8], strides = [1, 1]} : vector<1x128xf32> to vector<1x8xf32>
    %88 = arith.addf %86, %87 : vector<1x8xf32>
    %89 = vector.extract_strided_slice %59 {offsets = [0, 120], sizes = [1, 8], strides = [1, 1]} : vector<1x128xf32> to vector<1x8xf32>
    %90 = arith.addf %88, %89 : vector<1x8xf32>
    %91 = tpu.concatenate %56, %90 in 0 : vector<1x8xf32>, vector<1x8xf32> -> vector<2x8xf32>
    %c0_i32 = arith.constant 0 : i32
    %92 = arith.cmpi eq, %arg0, %c0_i32 : i32
    %93 = arith.extui %92 : i1 to i32
    %c0_i32_16 = arith.constant 0 : i32
    %94 = arith.cmpi ne, %93, %c0_i32_16 : i32
    scf.if %94 {
      %cst_23 = arith.constant 0.000000e+00 : f32
      %101 = vector.broadcast %cst_23 : f32 to vector<2x8xf32>
      %c0_24 = arith.constant 0 : index
      %c0_25 = arith.constant 0 : index
      %102 = vector.load %arg6[%c0_24, %c0_25] : memref<2x8xf32, #tpu.memory_space<vmem>>, vector<2x8xf32>
      tpu.vector_store %arg6[%c0_24, %c0_25], %101 {strides = array<i32>} : memref<2x8xf32, #tpu.memory_space<vmem>>, vector<2x8xf32>,
    } else {
    }
    %c0_17 = arith.constant 0 : index
    %c0_18 = arith.constant 0 : index
    %95 = vector.load %arg6[%c0_17, %c0_18] : memref<2x8xf32, #tpu.memory_space<vmem>>, vector<2x8xf32>
    %96 = arith.addf %95, %91 : vector<2x8xf32>
    %c0_19 = arith.constant 0 : index
    %c0_20 = arith.constant 0 : index
    %97 = vector.load %arg6[%c0_19, %c0_20] : memref<2x8xf32, #tpu.memory_space<vmem>>, vector<2x8xf32>
    tpu.vector_store %arg6[%c0_19, %c0_20], %96 {strides = array<i32>} : memref<2x8xf32, #tpu.memory_space<vmem>>, vector<2x8xf32>,
    %c0_i32_21 = arith.constant 0 : i32
    %98 = arith.cmpi eq, %arg0, %c0_i32_21 : i32
    %99 = arith.extui %98 : i1 to i32
    %c0_i32_22 = arith.constant 0 : i32
    %100 = arith.cmpi ne, %99, %c0_i32_22 : i32
    scf.if %100 {
      %c0_23 = arith.constant 0 : index
      %c0_24 = arith.constant 0 : index
      %101 = vector.load %arg6[%c0_23, %c0_24] : memref<2x8xf32, #tpu.memory_space<vmem>>, vector<2x8xf32>
      %102 = vector.extract_strided_slice %101 {offsets = [0, 0], sizes = [1, 8], strides = [1, 1]} : vector<2x8xf32> to vector<1x8xf32>
      %cst_25 = arith.constant 9.765625E-4 : f32
      %103 = vector.broadcast %cst_25 : f32 to vector<1x8xf32>
      %104 = arith.mulf %102, %103 : vector<1x8xf32>
      %105 = vector.extract_strided_slice %101 {offsets = [1, 0], sizes = [1, 8], strides = [1, 1]} : vector<2x8xf32> to vector<1x8xf32>
      %cst_26 = arith.constant 9.765625E-4 : f32
      %106 = vector.broadcast %cst_26 : f32 to vector<1x8xf32>
      %107 = arith.mulf %105, %106 : vector<1x8xf32>
      %108 = arith.mulf %104, %104 : vector<1x8xf32>
      %109 = arith.subf %107, %108 : vector<1x8xf32>
      %c0_27 = arith.constant 0 : index
      %c0_28 = arith.constant 0 : index
      %110 = vector.load %arg3[%c0_27, %c0_28] : memref<1x8xf32, #tpu.memory_space<vmem>>, vector<1x8xf32>
      %cst_29 = arith.constant 9.99999974E-6 : f32
      %111 = vector.broadcast %cst_29 : f32 to vector<1x8xf32>
      %112 = arith.addf %109, %111 : vector<1x8xf32>
      %113 = math.rsqrt %112 : vector<1x8xf32>
      %114 = arith.mulf %110, %113 : vector<1x8xf32>
      %c0_30 = arith.constant 0 : index
      %c0_31 = arith.constant 0 : index
      %115 = vector.load %arg4[%c0_30, %c0_31] : memref<1x8xf32, #tpu.memory_space<vmem>>, vector<1x8xf32>
      %116 = arith.mulf %104, %114 : vector<1x8xf32>
      %117 = arith.subf %115, %116 : vector<1x8xf32>
      %118 = tpu.concatenate %114, %114, %114, %114, %114, %114, %114, %114, %114, %114, %114, %114, %114, %114, %114, %114 in 1 : vector<1x8xf32>, vector<1x8xf32>, vector<1x8xf32>, vector<1x8xf32>, vector<1x8xf32>, vector<1x8xf32>, vector<1x8xf32>, vector<1x8xf32>, vector<1x8xf32>, vector<1x8xf32>, vector<1x8xf32>, vector<1x8xf32>, vector<1x8xf32>, vector<1x8xf32>, vector<1x8xf32>, vector<1x8xf32> -> vector<1x128xf32>
      %119 = tpu.concatenate %117, %117, %117, %117, %117, %117, %117, %117, %117, %117, %117, %117, %117, %117, %117, %117 in 1 : vector<1x8xf32>, vector<1x8xf32>, vector<1x8xf32>, vector<1x8xf32>, vector<1x8xf32>, vector<1x8xf32>, vector<1x8xf32>, vector<1x8xf32>, vector<1x8xf32>, vector<1x8xf32>, vector<1x8xf32>, vector<1x8xf32>, vector<1x8xf32>, vector<1x8xf32>, vector<1x8xf32>, vector<1x8xf32> -> vector<1x128xf32>
      %c0_32 = arith.constant 0 : index
      %c0_33 = arith.constant 0 : index
      %c0_34 = arith.constant 0 : index
      %120 = vector.load %arg5[%c0_32, %c0_33, %c0_34] : memref<4x16x128xf32, #tpu.memory_space<vmem>>, vector<4x16x128xf32>
      %121 = vector.shape_cast %118 : vector<1x128xf32> to vector<1x1x128xf32>
      %122 = vector.broadcast %121 : vector<1x1x128xf32> to vector<4x16x128xf32>
      %123 = arith.mulf %120, %122 : vector<4x16x128xf32>
      %124 = vector.shape_cast %119 : vector<1x128xf32> to vector<1x1x128xf32>
      %125 = vector.broadcast %124 : vector<1x1x128xf32> to vector<4x16x128xf32>
      %126 = arith.addf %123, %125 : vector<4x16x128xf32>
      %c0_35 = arith.constant 0 : index
      %c0_36 = arith.constant 0 : index
      %c0_37 = arith.constant 0 : index
      %127 = vector.load %arg5[%c0_35, %c0_36, %c0_37] : memref<4x16x128xf32, #tpu.memory_space<vmem>>, vector<4x16x128xf32>
      tpu.vector_store %arg5[%c0_35, %c0_36, %c0_37], %126 {strides = array<i32>} : memref<4x16x128xf32, #tpu.memory_space<vmem>>, vector<4x16x128xf32>,
    } else {
    }
    return
  }
  func.func @transform_0(%arg0: i32) -> (i32, i32, i32) {
    %c0_i32 = arith.constant 0 : i32
    %c0_i32_0 = arith.constant 0 : i32
    %c0_i32_1 = arith.constant 0 : i32
    return %arg0, %c0_i32, %c0_i32_0 : i32, i32, i32
  }
  func.func @transform_1(%arg0: i32) -> (i32, i32, i32) {
    %c0_i32 = arith.constant 0 : i32
    %c0_i32_0 = arith.constant 0 : i32
    %c0_i32_1 = arith.constant 0 : i32
    %c0_i32_2 = arith.constant 0 : i32
    return %c0_i32, %c0_i32_0, %c0_i32_1 : i32, i32, i32
  }
  func.func @transform_2(%arg0: i32) -> (i32, i32) {
    %c0_i32 = arith.constant 0 : i32
    %c0_i32_0 = arith.constant 0 : i32
    %c0_i32_1 = arith.constant 0 : i32
    return %c0_i32, %c0_i32_0 : i32, i32
  }
  func.func @transform_3(%arg0: i32) -> (i32, i32) {
    %c0_i32 = arith.constant 0 : i32
    %c0_i32_0 = arith.constant 0 : i32
    %c0_i32_1 = arith.constant 0 : i32
    return %c0_i32, %c0_i32_0 : i32, i32
  }
  func.func @transform_4(%arg0: i32) -> (i32, i32, i32) {
    %c0_i32 = arith.constant 0 : i32
    %c0_i32_0 = arith.constant 0 : i32
    %c0_i32_1 = arith.constant 0 : i32
    %c0_i32_2 = arith.constant 0 : i32
    return %c0_i32, %c0_i32_0, %c0_i32_1 : i32, i32, i32
  }
}

</mosaic_0001>

<llo_original>
// kernel: tpu_custom_call.1
$region0: #{tpu_custom_call.1}
  #allocation0 [shape = 'u32[]', space=smem, size = 0x4, offset = 0x4, fixed_abs, tag = 'smem constant byte address 0x4 - core index']
  #allocation1 [shape = 'u32[144,128]{1,0:T(1,128)}', space=vmem, size = 0x12000, scoped, tag = 'internal scratch']
  #allocation2 [shape = 'f32[2,8]{1,0:T(2,128)}', space=vmem, size = 0x400, scoped, tag = 'scratch operand']
  %s0 = inlined_call_operand.hbm [shape: f32[4,16,64], index: 0, kind: input, shape index: {}]
  %s1 = inlined_call_operand.hbm [shape: f32[3,64,128], index: 1, kind: input, shape index: {}]
  %s2 = inlined_call_operand.vmem [shape: f32[1,8], index: 2, kind: input, shape index: {}]
  %s3 = inlined_call_operand.vmem [shape: f32[1,8], index: 3, kind: input, shape index: {}]
  %s4 = inlined_call_operand.hbm [shape: f32[4,16,128], index: 4, kind: output, shape index: {}]
  %s5 = sld [smem:[#allocation0]]
  $region42: #{tpu_custom_call.1} parent=0
    _
  %s7 = ssub.s32 1, %s5
  %s8 = scalar_select 0, %s7, %s5
  $region1: #{tpu_custom_call.1} parent=0
    #allocation3 [shape = 'u8[32768]{0}', space=vmem, size = 0x8000, scoped, tag = 'input window, operand 0, single buffered']
    #allocation4 [shape = 's32[1]{0}', space=sflag, size = 0x4, scoped, tag = 'scoped memory for tpu_custom_call.1']
    #allocation5 [shape = 's32[1]{0}', space=sflag, size = 0x4, scoped, tag = 'scoped memory for tpu_custom_call.1']
    #allocation6 [shape = 'u8[98304]{0}', space=vmem, size = 0x18000, scoped, tag = 'input window, operand 1, single buffered']
    #allocation7 [shape = 's32[1]{0}', space=sflag, size = 0x4, scoped, tag = 'scoped memory for tpu_custom_call.1']
    #allocation8 [shape = 'u8[32768]{0}', space=vmem, size = 0x8000, scoped, tag = 'output window, operand 0, single buffered']
    %9 = vsyncpa [#allocation4], 0
    %10 = vsyncpa [#allocation7], 0
    %11 = vsyncpa [#allocation5], 0
    // Predicated region
    $region2: #{tpu_custom_call.1} parent=1 // pred_check
      _
    $region3: #{tpu_custom_call.1} parent=1 // pred_check_branch
      %13 = sbr.rel (0) target = $region5
    $region4: #{tpu_custom_call.1} parent=1 // pred_region
      %s15 = ssub.s32 1024, 1024
      %16 = vsyncadd [#allocation4], %s15
      %s17 = sshll.u32 [#allocation3], 4
      %s18 = int_to_ptr.vmem [resolvable:$true] %s17
      %23 = dma.hbm_to_vmem [thread:$0]  %s0, 1024, %s18, [#allocation4], 128, 128, 8
    $region5: #{tpu_custom_call.1} parent=1 // pred_fallthru
      _
    // Predicated region
    $region6: #{tpu_custom_call.1} parent=1 // pred_check
      _
    $region7: #{tpu_custom_call.1} parent=1 // pred_check_branch
      %25 = sbr.rel (0) target = $region9
    $region8: #{tpu_custom_call.1} parent=1 // pred_region
      %s27 = ssub.s32 3072, 3072
      %28 = vsyncadd [#allocation7], %s27
      %s29 = sshll.u32 [#allocation6], 4
      %s30 = int_to_ptr.vmem [resolvable:$true] %s29
      %35 = dma.hbm_to_vmem [thread:$0]  %s1, 3072, %s30, [#allocation7], 128, 128, 8
    $region9: #{tpu_custom_call.1} parent=1 // pred_fallthru
      _
    // Predicated region
    $region10: #{tpu_custom_call.1} parent=1 // pred_check
      _
    $region11: #{tpu_custom_call.1} parent=1 // pred_check_branch
      %37 = sbr.rel (0) target = $region13
    $region12: #{tpu_custom_call.1} parent=1 // pred_region
      _
    $region13: #{tpu_custom_call.1} parent=1 // pred_fallthru
      _
    // Predicated region
    $region14: #{tpu_custom_call.1} parent=1 // pred_check
      _
    $region15: #{tpu_custom_call.1} parent=1 // pred_check_branch
      %39 = sbr.rel (0) target = $region17
    $region16: #{tpu_custom_call.1} parent=1 // pred_region
      _
    $region17: #{tpu_custom_call.1} parent=1 // pred_fallthru
      _
    // Predicated region
    $region18: #{tpu_custom_call.1} parent=1 // pred_check
      _
    $region19: #{tpu_custom_call.1} parent=1 // pred_check_branch
      %41 = sbr.rel (0) target = $region21
    $region20: #{tpu_custom_call.1} parent=1 // pred_region
      %42 = dma.done [#allocation4], 1024
    $region21: #{tpu_custom_call.1} parent=1 // pred_fallthru
      _
    // Predicated region
    $region22: #{tpu_custom_call.1} parent=1 // pred_check
      _
    $region23: #{tpu_custom_call.1} parent=1 // pred_check_branch
      %44 = sbr.rel (0) target = $region25
    $region24: #{tpu_custom_call.1} parent=1 // pred_region
      %45 = dma.done [#allocation7], 3072
    $region25: #{tpu_custom_call.1} parent=1 // pred_fallthru
      _
    %v46 = vld [vmem:[#allocation3] sm:$0xff]
    %v47 = vld [vmem:[#allocation3 + $0x8] sm:$0xff]
    %v48 = vld [vmem:[#allocation3 + $0x10] sm:$0xff]
    %v49 = vld [vmem:[#allocation3 + $0x18] sm:$0xff]
    %v50 = vld [vmem:[#allocation3 + $0x20] sm:$0xff]
    %v51 = vld [vmem:[#allocation3 + $0x28] sm:$0xff]
    %v52 = vld [vmem:[#allocation3 + $0x30] sm:$0xff]
    %v53 = vld [vmem:[#allocation3 + $0x38] sm:$0xff]
    %vm62 = vcmask 1040384
    %v63 = vrot.slane %v46, 7
    %v64 = vrot.slane %v47, 7
    %v65 = vsel %vm62, %v63, %v64
    %v66 = vrot.slane %v48, 7
    %v67 = vrot.slane %v49, 7
    %v68 = vsel %vm62, %v66, %v67
    %v69 = vrot.slane %v50, 7
    %v70 = vrot.slane %v51, 7
    %v71 = vsel %vm62, %v69, %v70
    %v72 = vrot.slane %v52, 7
    %v73 = vrot.slane %v53, 7
    %v74 = vsel %vm62, %v72, %v73
    %v83 = vsel %vm62, 0.0, %v63
    %v84 = vsel %vm62, 0.0, %v66
    %v85 = vsel %vm62, 0.0, %v69
    %v86 = vsel %vm62, 0.0, %v72
    %v87 = vsel %vm62, %v64, 0.0
    %v88 = vsel %vm62, %v67, 0.0
    %v89 = vsel %vm62, %v70, 0.0
    %v90 = vsel %vm62, %v73, 0.0
    %v91 = vld [vmem:[#allocation6] sm:$0xff]
    %v92 = vld [vmem:[#allocation6 + $0x8] sm:$0xff]
    %v93 = vld [vmem:[#allocation6 + $0x10] sm:$0xff]
    %v94 = vld [vmem:[#allocation6 + $0x18] sm:$0xff]
    %v95 = vld [vmem:[#allocation6 + $0x20] sm:$0xff]
    %v96 = vld [vmem:[#allocation6 + $0x28] sm:$0xff]
    %v97 = vld [vmem:[#allocation6 + $0x30] sm:$0xff]
    %v98 = vld [vmem:[#allocation6 + $0x38] sm:$0xff]
    %vm107 = vcmask 1046528
    %v108 = vrot.slane %v83, 1
    %v109 = vrot.slane %v65, 1
    %v110 = vsel %vm107, %v108, %v109
    %v111 = vrot.slane %v87, 1
    %v112 = vsel %vm107, %v109, %v111
    %v113 = vrot.slane %v84, 1
    %v114 = vrot.slane %v68, 1
    %v115 = vsel %vm107, %v113, %v114
    %v116 = vrot.slane %v88, 1
    %v117 = vsel %vm107, %v114, %v116
    %v118 = vrot.slane %v85, 1
    %v119 = vrot.slane %v71, 1
    %v120 = vsel %vm107, %v118, %v119
    %v121 = vrot.slane %v89, 1
    %v122 = vsel %vm107, %v119, %v121
    %v123 = vrot.slane %v86, 1
    %v124 = vrot.slane %v74, 1
    %v125 = vsel %vm107, %v123, %v124
    %v126 = vrot.slane %v90, 1
    %v127 = vsel %vm107, %v124, %v126
    %s128 = scalar_lea.vmem [#allocation6], 64
    %v129 = vld [vmem:[%s128] sm:$0xff]
    %v130 = vld [vmem:[%s128 + $0x8] sm:$0xff]
    %v131 = vld [vmem:[%s128 + $0x10] sm:$0xff]
    %v132 = vld [vmem:[%s128 + $0x18] sm:$0xff]
    %v133 = vld [vmem:[%s128 + $0x20] sm:$0xff]
    %v134 = vld [vmem:[%s128 + $0x28] sm:$0xff]
    %v135 = vld [vmem:[%s128 + $0x30] sm:$0xff]
    %v136 = vld [vmem:[%s128 + $0x38] sm:$0xff]
    %vm137 = vcmask 523264
    %v138 = vsel %vm137, %v110, 0
    %v140 = vsel %vm137, %v112, 0
    %v142 = vsel %vm137, %v115, 0
    %v144 = vsel %vm137, %v117, 0
    %v146 = vsel %vm137, %v120, 0
    %v148 = vsel %vm137, %v122, 0
    %v150 = vsel %vm137, %v125, 0
    %v152 = vsel %vm137, %v127, 0
    %154 = vmatprep.subr.mxu0 0.0
    %155 = vmatpush1.msra.mxu0 0.0
    %156 = vmatprep.subr.mxu0 0.0
    %157 = vmatpush1.msra.mxu0 0.0
    %158 = vmatprep.subr.mxu0 0.0
    %159 = vmatpush1.msra.mxu0 0.0
    %160 = vmatprep.subr.mxu0 0.0
    %161 = vmatpush1.msra.mxu0 0.0
    %162 = vmatprep.subr.mxu0 0.0
    %163 = vmatpush1.msra.mxu0 0.0
    %164 = vmatprep.subr.mxu0 0.0
    %165 = vmatpush1.msra.mxu0 0.0
    %166 = vmatprep.subr.mxu0 0.0
    %167 = vmatpush1.msra.mxu0 0.0
    %168 = vmatprep.subr.mxu0 0.0
    %169 = vmatpush1.msra.mxu0 0.0
    %170 = vmatprep.subr.mxu0 0.0
    %171 = vmatpush1.msra.mxu0 %v136
    %172 = vmatprep.subr.mxu0 0.0
    %173 = vmatpush1.msra.mxu0 %v135
    %174 = vmatprep.subr.mxu0 0.0
    %175 = vmatpush1.msra.mxu0 %v134
    %176 = vmatprep.subr.mxu0 0.0
    %177 = vmatpush1.msra.mxu0 %v133
    %178 = vmatprep.subr.mxu0 0.0
    %179 = vmatpush1.msra.mxu0 %v132
    %180 = vmatprep.subr.mxu0 0.0
    %181 = vmatpush1.msra.mxu0 %v131
    %182 = vmatprep.subr.mxu0 0.0
    %183 = vmatpush1.msra.mxu0 %v130
    %184 = vmatprep.subr.mxu0 0.0
    %185 = vmatpush1.msra.mxu0 %v129
    %186 = vmatprep.subr.mxu0 0.0
    %187 = vmatpush2.msra.mxu0 0.0
    %188 = vmatprep.subr.mxu0 0.0
    %189 = vmatpush2.msra.mxu0 0.0
    %190 = vmatprep.subr.mxu0 0.0
    %191 = vmatpush2.msra.mxu0 0.0
    %192 = vmatprep.subr.mxu0 0.0
    %193 = vmatpush2.msra.mxu0 0.0
    %194 = vmatprep.subr.mxu0 0.0
    %195 = vmatpush2.msra.mxu0 0.0
    %196 = vmatprep.subr.mxu0 0.0
    %197 = vmatpush2.msra.mxu0 0.0
    %198 = vmatprep.subr.mxu0 0.0
    %199 = vmatpush2.msra.mxu0 0.0
    %200 = vmatprep.subr.mxu0 0.0
    %201 = vmatpush2.msra.mxu0 0.0
    %202 = vmatprep.subr.mxu0 0.0
    %203 = vmatpush2.msra.mxu0 0.0
    %204 = vmatprep.subr.mxu0 0.0
    %205 = vmatpush2.msra.mxu0 0.0
    %206 = vmatprep.subr.mxu0 0.0
    %207 = vmatpush2.msra.mxu0 0.0
    %208 = vmatprep.subr.mxu0 0.0
    %209 = vmatpush2.msra.mxu0 0.0
    %210 = vmatprep.subr.mxu0 0.0
    %211 = vmatpush2.msra.mxu0 0.0
    %212 = vmatprep.subr.mxu0 0.0
    %213 = vmatpush2.msra.mxu0 0.0
    %214 = vmatprep.subr.mxu0 0.0
    %215 = vmatpush2.msra.mxu0 0.0
    %216 = vmatprep.subr.mxu0 0.0
    %217 = vmatpush2.msra.mxu0 0.0
    %218 = vmatprep.mubr.f32.mxu0 0.0
    %219 = vmatmul.mubr.f32.gmra.mxu0 %v138
    %v220 = vpop.f32.mrf.mxu0
    %v221 = vadd.f32 0.0, %v220
    %v222 = vpop.f32.mrf.mxu0
    %223 = vmatprep.mubr.f32.mxu0 0.0
    %224 = vmatmul.mubr.f32.gmra.mxu0 %v140
    %v225 = vpop.f32.mrf.mxu0
    %v226 = vadd.f32 0.0, %v225
    %v227 = vpop.f32.mrf.mxu0
    %228 = vmatprep.mubr.f32.mxu0 0.0
    %229 = vmatmul.mubr.f32.gmra.mxu0 %v142
    %v230 = vpop.f32.mrf.mxu0
    %v231 = vadd.f32 0.0, %v230
    %v232 = vpop.f32.mrf.mxu0
    %233 = vmatprep.mubr.f32.mxu0 0.0
    %234 = vmatmul.mubr.f32.gmra.mxu0 %v144
    %v235 = vpop.f32.mrf.mxu0
    %v236 = vadd.f32 0.0, %v235
    %v237 = vpop.f32.mrf.mxu0
    %238 = vmatprep.mubr.f32.mxu0 0.0
    %239 = vmatmul.mubr.f32.gmra.mxu0 %v146
    %v240 = vpop.f32.mrf.mxu0
    %v241 = vadd.f32 0.0, %v240
    %v242 = vpop.f32.mrf.mxu0
    %243 = vmatprep.mubr.f32.mxu0 0.0
    %244 = vmatmul.mubr.f32.gmra.mxu0 %v148
    %v245 = vpop.f32.mrf.mxu0
    %v246 = vadd.f32 0.0, %v245
    %v247 = vpop.f32.mrf.mxu0
    %248 = vmatprep.mubr.f32.mxu0 0.0
    %249 = vmatmul.mubr.f32.gmra.mxu0 %v150
    %v250 = vpop.f32.mrf.mxu0
    %v251 = vadd.f32 0.0, %v250
    %v252 = vpop.f32.mrf.mxu0
    %253 = vmatprep.mubr.f32.mxu0 0.0
    %254 = vmatmul.mubr.f32.gmra.mxu0 %v152
    %v255 = vpop.f32.mrf.mxu0
    %v256 = vadd.f32 0.0, %v255
    %v257 = vpop.f32.mrf.mxu0
    %258 = vdwg.mxu0
    %v259 = vsel %vm137, %v83, 0
    %v261 = vsel %vm137, %v65, 0
    %v263 = vsel %vm137, %v84, 0
    %v265 = vsel %vm137, %v68, 0
    %v267 = vsel %vm137, %v85, 0
    %v269 = vsel %vm137, %v71, 0
    %v271 = vsel %vm137, %v86, 0
    %v273 = vsel %vm137, %v74, 0
    %275 = vmatprep.subr.mxu0 0.0
    %276 = vmatpush1.msra.mxu0 0.0
    %277 = vmatprep.subr.mxu0 0.0
    %278 = vmatpush1.msra.mxu0 0.0
    %279 = vmatprep.subr.mxu0 0.0
    %280 = vmatpush1.msra.mxu0 0.0
    %281 = vmatprep.subr.mxu0 0.0
    %282 = vmatpush1.msra.mxu0 0.0
    %283 = vmatprep.subr.mxu0 0.0
    %284 = vmatpush1.msra.mxu0 0.0
    %285 = vmatprep.subr.mxu0 0.0
    %286 = vmatpush1.msra.mxu0 0.0
    %287 = vmatprep.subr.mxu0 0.0
    %288 = vmatpush1.msra.mxu0 0.0
    %289 = vmatprep.subr.mxu0 0.0
    %290 = vmatpush1.msra.mxu0 0.0
    %291 = vmatprep.subr.mxu0 0.0
    %292 = vmatpush1.msra.mxu0 %v98
    %293 = vmatprep.subr.mxu0 0.0
    %294 = vmatpush1.msra.mxu0 %v97
    %295 = vmatprep.subr.mxu0 0.0
    %296 = vmatpush1.msra.mxu0 %v96
    %297 = vmatprep.subr.mxu0 0.0
    %298 = vmatpush1.msra.mxu0 %v95
    %299 = vmatprep.subr.mxu0 0.0
    %300 = vmatpush1.msra.mxu0 %v94
    %301 = vmatprep.subr.mxu0 0.0
    %302 = vmatpush1.msra.mxu0 %v93
    %303 = vmatprep.subr.mxu0 0.0
    %304 = vmatpush1.msra.mxu0 %v92
    %305 = vmatprep.subr.mxu0 0.0
    %306 = vmatpush1.msra.mxu0 %v91
    %307 = vmatprep.subr.mxu0 0.0
    %308 = vmatpush2.msra.mxu0 0.0
    %309 = vmatprep.subr.mxu0 0.0
    %310 = vmatpush2.msra.mxu0 0.0
    %311 = vmatprep.subr.mxu0 0.0
    %312 = vmatpush2.msra.mxu0 0.0
    %313 = vmatprep.subr.mxu0 0.0
    %314 = vmatpush2.msra.mxu0 0.0
    %315 = vmatprep.subr.mxu0 0.0
    %316 = vmatpush2.msra.mxu0 0.0
    %317 = vmatprep.subr.mxu0 0.0
    %318 = vmatpush2.msra.mxu0 0.0
    %319 = vmatprep.subr.mxu0 0.0
    %320 = vmatpush2.msra.mxu0 0.0
    %321 = vmatprep.subr.mxu0 0.0
    %322 = vmatpush2.msra.mxu0 0.0
    %323 = vmatprep.subr.mxu0 0.0
    %324 = vmatpush2.msra.mxu0 0.0
    %325 = vmatprep.subr.mxu0 0.0
    %326 = vmatpush2.msra.mxu0 0.0
    %327 = vmatprep.subr.mxu0 0.0
    %328 = vmatpush2.msra.mxu0 0.0
    %329 = vmatprep.subr.mxu0 0.0
    %330 = vmatpush2.msra.mxu0 0.0
    %331 = vmatprep.subr.mxu0 0.0
    %332 = vmatpush2.msra.mxu0 0.0
    %333 = vmatprep.subr.mxu0 0.0
    %334 = vmatpush2.msra.mxu0 0.0
    %335 = vmatprep.subr.mxu0 0.0
    %336 = vmatpush2.msra.mxu0 0.0
    %337 = vmatprep.subr.mxu0 0.0
    %338 = vmatpush2.msra.mxu0 0.0
    %339 = vmatprep.mubr.f32.mxu0 0.0
    %340 = vmatmul.mubr.f32.gmra.mxu0 %v259
    %v341 = vpop.f32.mrf.mxu0
    %v342 = vadd.f32 %v221, %v341
    %v343 = vpop.f32.mrf.mxu0
    %344 = vmatprep.mubr.f32.mxu0 0.0
    %345 = vmatmul.mubr.f32.gmra.mxu0 %v261
    %v346 = vpop.f32.mrf.mxu0
    %v347 = vadd.f32 %v226, %v346
    %v348 = vpop.f32.mrf.mxu0
    %349 = vmatprep.mubr.f32.mxu0 0.0
    %350 = vmatmul.mubr.f32.gmra.mxu0 %v263
    %v351 = vpop.f32.mrf.mxu0
    %v352 = vadd.f32 %v231, %v351
    %v353 = vpop.f32.mrf.mxu0
    %354 = vmatprep.mubr.f32.mxu0 0.0
    %355 = vmatmul.mubr.f32.gmra.mxu0 %v265
    %v356 = vpop.f32.mrf.mxu0
    %v357 = vadd.f32 %v236, %v356
    %v358 = vpop.f32.mrf.mxu0
    %359 = vmatprep.mubr.f32.mxu0 0.0
    %360 = vmatmul.mubr.f32.gmra.mxu0 %v267
    %v361 = vpop.f32.mrf.mxu0
    %v362 = vadd.f32 %v241, %v361
    %v363 = vpop.f32.mrf.mxu0
    %364 = vmatprep.mubr.f32.mxu0 0.0
    %365 = vmatmul.mubr.f32.gmra.mxu0 %v269
    %v366 = vpop.f32.mrf.mxu0
    %v367 = vadd.f32 %v246, %v366
    %v368 = vpop.f32.mrf.mxu0
    %369 = vmatprep.mubr.f32.mxu0 0.0
    %370 = vmatmul.mubr.f32.gmra.mxu0 %v271
    %v371 = vpop.f32.mrf.mxu0
    %v372 = vadd.f32 %v251, %v371
    %v373 = vpop.f32.mrf.mxu0
    %374 = vmatprep.mubr.f32.mxu0 0.0
    %375 = vmatmul.mubr.f32.gmra.mxu0 %v273
    %v376 = vpop.f32.mrf.mxu0
    %v377 = vadd.f32 %v256, %v376
    %v378 = vpop.f32.mrf.mxu0
    %379 = vdwg.mxu0
    %vm380 = vcmask 1045504
    %v381 = vrot.slane %v83, 2
    %v382 = vrot.slane %v65, 2
    %v383 = vsel %vm380, %v381, %v382
    %v384 = vrot.slane %v87, 2
    %v385 = vsel %vm380, %v382, %v384
    %v386 = vrot.slane %v84, 2
    %v387 = vrot.slane %v68, 2
    %v388 = vsel %vm380, %v386, %v387
    %v389 = vrot.slane %v88, 2
    %v390 = vsel %vm380, %v387, %v389
    %v391 = vrot.slane %v85, 2
    %v392 = vrot.slane %v71, 2
    %v393 = vsel %vm380, %v391, %v392
    %v394 = vrot.slane %v89, 2
    %v395 = vsel %vm380, %v392, %v394
    %v396 = vrot.slane %v86, 2
    %v397 = vrot.slane %v74, 2
    %v398 = vsel %vm380, %v396, %v397
    %v399 = vrot.slane %v90, 2
    %v400 = vsel %vm380, %v397, %v399
    %s401 = scalar_lea.vmem [#allocation6], 128
    %v402 = vld [vmem:[%s401] sm:$0xff]
    %v403 = vld [vmem:[%s401 + $0x8] sm:$0xff]
    %v404 = vld [vmem:[%s401 + $0x10] sm:$0xff]
    %v405 = vld [vmem:[%s401 + $0x18] sm:$0xff]
    %v406 = vld [vmem:[%s401 + $0x20] sm:$0xff]
    %v407 = vld [vmem:[%s401 + $0x28] sm:$0xff]
    %v408 = vld [vmem:[%s401 + $0x30] sm:$0xff]
    %v409 = vld [vmem:[%s401 + $0x38] sm:$0xff]
    %v410 = vsel %vm137, %v383, 0
    %v412 = vsel %vm137, %v385, 0
    %v414 = vsel %vm137, %v388, 0
    %v416 = vsel %vm137, %v390, 0
    %v418 = vsel %vm137, %v393, 0
    %v420 = vsel %vm137, %v395, 0
    %v422 = vsel %vm137, %v398, 0
    %v424 = vsel %vm137, %v400, 0
    %426 = vmatprep.subr.mxu0 0.0
    %427 = vmatpush1.msra.mxu0 0.0
    %428 = vmatprep.subr.mxu0 0.0
    %429 = vmatpush1.msra.mxu0 0.0
    %430 = vmatprep.subr.mxu0 0.0
    %431 = vmatpush1.msra.mxu0 0.0
    %432 = vmatprep.subr.mxu0 0.0
    %433 = vmatpush1.msra.mxu0 0.0
    %434 = vmatprep.subr.mxu0 0.0
    %435 = vmatpush1.msra.mxu0 0.0
    %436 = vmatprep.subr.mxu0 0.0
    %437 = vmatpush1.msra.mxu0 0.0
    %438 = vmatprep.subr.mxu0 0.0
    %439 = vmatpush1.msra.mxu0 0.0
    %440 = vmatprep.subr.mxu0 0.0
    %441 = vmatpush1.msra.mxu0 0.0
    %442 = vmatprep.subr.mxu0 0.0
    %443 = vmatpush1.msra.mxu0 %v409
    %444 = vmatprep.subr.mxu0 0.0
    %445 = vmatpush1.msra.mxu0 %v408
    %446 = vmatprep.subr.mxu0 0.0
    %447 = vmatpush1.msra.mxu0 %v407
    %448 = vmatprep.subr.mxu0 0.0
    %449 = vmatpush1.msra.mxu0 %v406
    %450 = vmatprep.subr.mxu0 0.0
    %451 = vmatpush1.msra.mxu0 %v405
    %452 = vmatprep.subr.mxu0 0.0
    %453 = vmatpush1.msra.mxu0 %v404
    %454 = vmatprep.subr.mxu0 0.0
    %455 = vmatpush1.msra.mxu0 %v403
    %456 = vmatprep.subr.mxu0 0.0
    %457 = vmatpush1.msra.mxu0 %v402
    %458 = vmatprep.subr.mxu0 0.0
    %459 = vmatpush2.msra.mxu0 0.0
    %460 = vmatprep.subr.mxu0 0.0
    %461 = vmatpush2.msra.mxu0 0.0
    %462 = vmatprep.subr.mxu0 0.0
    %463 = vmatpush2.msra.mxu0 0.0
    %464 = vmatprep.subr.mxu0 0.0
    %465 = vmatpush2.msra.mxu0 0.0
    %466 = vmatprep.subr.mxu0 0.0
    %467 = vmatpush2.msra.mxu0 0.0
    %468 = vmatprep.subr.mxu0 0.0
    %469 = vmatpush2.msra.mxu0 0.0
    %470 = vmatprep.subr.mxu0 0.0
    %471 = vmatpush2.msra.mxu0 0.0
    %472 = vmatprep.subr.mxu0 0.0
    %473 = vmatpush2.msra.mxu0 0.0
    %474 = vmatprep.subr.mxu0 0.0
    %475 = vmatpush2.msra.mxu0 0.0
    %476 = vmatprep.subr.mxu0 0.0
    %477 = vmatpush2.msra.mxu0 0.0
    %478 = vmatprep.subr.mxu0 0.0
    %479 = vmatpush2.msra.mxu0 0.0
    %480 = vmatprep.subr.mxu0 0.0
    %481 = vmatpush2.msra.mxu0 0.0
    %482 = vmatprep.subr.mxu0 0.0
    %483 = vmatpush2.msra.mxu0 0.0
    %484 = vmatprep.subr.mxu0 0.0
    %485 = vmatpush2.msra.mxu0 0.0
    %486 = vmatprep.subr.mxu0 0.0
    %487 = vmatpush2.msra.mxu0 0.0
    %488 = vmatprep.subr.mxu0 0.0
    %489 = vmatpush2.msra.mxu0 0.0
    %490 = vmatprep.mubr.f32.mxu0 0.0
    %491 = vmatmul.mubr.f32.gmra.mxu0 %v410
    %v492 = vpop.f32.mrf.mxu0
    %v493 = vadd.f32 0.0, %v492
    %v494 = vpop.f32.mrf.mxu0
    %495 = vmatprep.mubr.f32.mxu0 0.0
    %496 = vmatmul.mubr.f32.gmra.mxu0 %v412
    %v497 = vpop.f32.mrf.mxu0
    %v498 = vadd.f32 0.0, %v497
    %v499 = vpop.f32.mrf.mxu0
    %500 = vmatprep.mubr.f32.mxu0 0.0
    %501 = vmatmul.mubr.f32.gmra.mxu0 %v414
    %v502 = vpop.f32.mrf.mxu0
    %v503 = vadd.f32 0.0, %v502
    %v504 = vpop.f32.mrf.mxu0
    %505 = vmatprep.mubr.f32.mxu0 0.0
    %506 = vmatmul.mubr.f32.gmra.mxu0 %v416
    %v507 = vpop.f32.mrf.mxu0
    %v508 = vadd.f32 0.0, %v507
    %v509 = vpop.f32.mrf.mxu0
    %510 = vmatprep.mubr.f32.mxu0 0.0
    %511 = vmatmul.mubr.f32.gmra.mxu0 %v418
    %v512 = vpop.f32.mrf.mxu0
    %v513 = vadd.f32 0.0, %v512
    %v514 = vpop.f32.mrf.mxu0
    %515 = vmatprep.mubr.f32.mxu0 0.0
    %516 = vmatmul.mubr.f32.gmra.mxu0 %v420
    %v517 = vpop.f32.mrf.mxu0
    %v518 = vadd.f32 0.0, %v517
    %v519 = vpop.f32.mrf.mxu0
    %520 = vmatprep.mubr.f32.mxu0 0.0
    %521 = vmatmul.mubr.f32.gmra.mxu0 %v422
    %v522 = vpop.f32.mrf.mxu0
    %v523 = vadd.f32 0.0, %v522
    %v524 = vpop.f32.mrf.mxu0
    %525 = vmatprep.mubr.f32.mxu0 0.0
    %526 = vmatmul.mubr.f32.gmra.mxu0 %v424
    %v527 = vpop.f32.mrf.mxu0
    %v528 = vadd.f32 0.0, %v527
    %v529 = vpop.f32.mrf.mxu0
    %530 = vdwg.mxu0
    %v531 = vadd.f32 %v342, %v493
    %v532 = vadd.f32 %v347, %v498
    %v533 = vadd.f32 %v352, %v503
    %v534 = vadd.f32 %v357, %v508
    %v535 = vadd.f32 %v362, %v513
    %v536 = vadd.f32 %v367, %v518
    %v537 = vadd.f32 %v372, %v523
    %v538 = vadd.f32 %v377, %v528
    %s539 = smul.u32 0, 4
    %s540 = smul.u32 %s539, 16
    %s541 = scalar_lea.vmem [#allocation8], %s540
    %542 = vst [vmem:[%s541] sm:$0xff] %v531
    %543 = vst [vmem:[%s541 + $0x8] sm:$0xff] %v532
    %544 = vst [vmem:[%s541 + $0x10] sm:$0xff] %v533
    %545 = vst [vmem:[%s541 + $0x18] sm:$0xff] %v534
    %546 = vst [vmem:[%s541 + $0x20] sm:$0xff] %v535
    %547 = vst [vmem:[%s541 + $0x28] sm:$0xff] %v536
    %548 = vst [vmem:[%s541 + $0x30] sm:$0xff] %v537
    %549 = vst [vmem:[%s541 + $0x38] sm:$0xff] %v538
    %v550 = vadd.f32 %v531, %v532
    %v551 = vadd.f32 %v550, %v533
    %v552 = vadd.f32 %v551, %v534
    %v553 = vadd.f32 %v552, %v535
    %v554 = vadd.f32 %v553, %v536
    %v555 = vadd.f32 %v554, %v537
    %v556 = vadd.f32 %v555, %v538
    %v557 = vrot.slane %v556, 4
    %v558 = vadd.f32 %v556, %v557
    %v559 = vrot.slane %v558, 2
    %v560 = vadd.f32 %v558, %v559
    %v561 = vrot.slane %v560, 1
    %v562 = vadd.f32 %v560, %v561
    %564 = vrot.lane.b32.xlu0 %v562, 120
    %v565 = vpop.permute.xlu0 %564
    %v567 = vadd.f32 %v562, %v565
    %568 = vrot.lane.b32.xlu0 %v562, 112
    %v569 = vpop.permute.xlu0 %568
    %v571 = vadd.f32 %v567, %v569
    %572 = vrot.lane.b32.xlu0 %v562, 104
    %v573 = vpop.permute.xlu0 %572
    %v575 = vadd.f32 %v571, %v573
    %576 = vrot.lane.b32.xlu0 %v562, 96
    %v577 = vpop.permute.xlu0 %576
    %v579 = vadd.f32 %v575, %v577
    %580 = vrot.lane.b32.xlu0 %v562, 88
    %v581 = vpop.permute.xlu0 %580
    %v583 = vadd.f32 %v579, %v581
    %584 = vrot.lane.b32.xlu0 %v562, 80
    %v585 = vpop.permute.xlu0 %584
    %v587 = vadd.f32 %v583, %v585
    %588 = vrot.lane.b32.xlu0 %v562, 72
    %v589 = vpop.permute.xlu0 %588
    %v591 = vadd.f32 %v587, %v589
    %592 = vrot.lane.b32.xlu0 %v562, 64
    %v593 = vpop.permute.xlu0 %592
    %v595 = vadd.f32 %v591, %v593
    %596 = vrot.lane.b32.xlu0 %v562, 56
    %v597 = vpop.permute.xlu0 %596
    %v599 = vadd.f32 %v595, %v597
    %600 = vrot.lane.b32.xlu0 %v562, 48
    %v601 = vpop.permute.xlu0 %600
    %v603 = vadd.f32 %v599, %v601
    %604 = vrot.lane.b32.xlu0 %v562, 40
    %v605 = vpop.permute.xlu0 %604
    %v607 = vadd.f32 %v603, %v605
    %608 = vrot.lane.b32.xlu0 %v562, 32
    %v609 = vpop.permute.xlu0 %608
    %v611 = vadd.f32 %v607, %v609
    %612 = vrot.lane.b32.xlu0 %v562, 24
    %v613 = vpop.permute.xlu0 %612
    %v615 = vadd.f32 %v611, %v613
    %616 = vrot.lane.b32.xlu0 %v562, 16
    %v617 = vpop.permute.xlu0 %616
    %v619 = vadd.f32 %v615, %v617
    %620 = vrot.lane.b32.xlu0 %v562, 8
    %v621 = vpop.permute.xlu0 %620
    %v623 = vadd.f32 %v619, %v621
    %v624 = vmul.f32 %v531, %v531
    %v625 = vmul.f32 %v532, %v532
    %v626 = vmul.f32 %v533, %v533
    %v627 = vmul.f32 %v534, %v534
    %v628 = vmul.f32 %v535, %v535
    %v629 = vmul.f32 %v536, %v536
    %v630 = vmul.f32 %v537, %v537
    %v631 = vmul.f32 %v538, %v538
    %v632 = vadd.f32 %v624, %v625
    %v633 = vadd.f32 %v632, %v626
    %v634 = vadd.f32 %v633, %v627
    %v635 = vadd.f32 %v634, %v628
    %v636 = vadd.f32 %v635, %v629
    %v637 = vadd.f32 %v636, %v630
    %v638 = vadd.f32 %v637, %v631
    %v639 = vrot.slane %v638, 4
    %v640 = vadd.f32 %v638, %v639
    %v641 = vrot.slane %v640, 2
    %v642 = vadd.f32 %v640, %v641
    %v643 = vrot.slane %v642, 1
    %v644 = vadd.f32 %v642, %v643
    %646 = vrot.lane.b32.xlu0 %v644, 120
    %v647 = vpop.permute.xlu0 %646
    %v649 = vadd.f32 %v644, %v647
    %650 = vrot.lane.b32.xlu0 %v644, 112
    %v651 = vpop.permute.xlu0 %650
    %v653 = vadd.f32 %v649, %v651
    %654 = vrot.lane.b32.xlu0 %v644, 104
    %v655 = vpop.permute.xlu0 %654
    %v657 = vadd.f32 %v653, %v655
    %658 = vrot.lane.b32.xlu0 %v644, 96
    %v659 = vpop.permute.xlu0 %658
    %v661 = vadd.f32 %v657, %v659
    %662 = vrot.lane.b32.xlu0 %v644, 88
    %v663 = vpop.permute.xlu0 %662
    %v665 = vadd.f32 %v661, %v663
    %666 = vrot.lane.b32.xlu0 %v644, 80
    %v667 = vpop.permute.xlu0 %666
    %v669 = vadd.f32 %v665, %v667
    %670 = vrot.lane.b32.xlu0 %v644, 72
    %v671 = vpop.permute.xlu0 %670
    %v673 = vadd.f32 %v669, %v671
    %674 = vrot.lane.b32.xlu0 %v644, 64
    %v675 = vpop.permute.xlu0 %674
    %v677 = vadd.f32 %v673, %v675
    %678 = vrot.lane.b32.xlu0 %v644, 56
    %v679 = vpop.permute.xlu0 %678
    %v681 = vadd.f32 %v677, %v679
    %682 = vrot.lane.b32.xlu0 %v644, 48
    %v683 = vpop.permute.xlu0 %682
    %v685 = vadd.f32 %v681, %v683
    %686 = vrot.lane.b32.xlu0 %v644, 40
    %v687 = vpop.permute.xlu0 %686
    %v689 = vadd.f32 %v685, %v687
    %690 = vrot.lane.b32.xlu0 %v644, 32
    %v691 = vpop.permute.xlu0 %690
    %v693 = vadd.f32 %v689, %v691
    %694 = vrot.lane.b32.xlu0 %v644, 24
    %v695 = vpop.permute.xlu0 %694
    %v697 = vadd.f32 %v693, %v695
    %698 = vrot.lane.b32.xlu0 %v644, 16
    %v699 = vpop.permute.xlu0 %698
    %v701 = vadd.f32 %v697, %v699
    %702 = vrot.lane.b32.xlu0 %v644, 8
    %v703 = vpop.permute.xlu0 %702
    %v705 = vadd.f32 %v701, %v703
    %v707 = vrot.slane %v705, 7
    %v709 = vsel %vm62, %v623, %v707
    %p710 = scmp.eq.s32.totalorder 0, 0
    // Predicated region
    $region26: #{tpu_custom_call.1} parent=1 // pred_check
      %p711 = pneg %p710
    $region27: #{tpu_custom_call.1} parent=1 // pred_check_branch
      %713 = sbr.rel (%p711) target = $region29
    $region28: #{tpu_custom_call.1} parent=1 // pred_region
      %vm714 = vcmask 58368
      %715 = vst.msk [vmem:[#allocation2] sm:$0x3] %vm714, 0.0
    $region29: #{tpu_custom_call.1} parent=1 // pred_fallthru
      _
    %v716 = vld [vmem:[#allocation2] sm:$0x3]
    %v717 = vadd.f32 %v716, %v709
    %vm718 = vcmask 58368
    %719 = vst.msk [vmem:[#allocation2] sm:$0x3] %vm718, %v717
    // Predicated region
    $region30: #{tpu_custom_call.1} parent=1 // pred_check
      %p720 = pneg %p710
    $region31: #{tpu_custom_call.1} parent=1 // pred_check_branch
      %722 = sbr.rel (%p720) target = $region33
    $region32: #{tpu_custom_call.1} parent=1 // pred_region
      %v723 = vld [vmem:[#allocation2] sm:$0x3]
      %v724 = vmul.f32 %v723, 0.0009765625
      %v725 = vmul.f32 %v724, %v724
      %v727 = vrot.slane %v725, 7
      %v729 = vsub.f32 %v724, %v727
      %v730 = vld [vmem:[%s2] sm:$0x1]
      %v731 = vadd.f32 %v729, 1e-05
      %v732 = vrsqrt.pop %v731
      %v735 = vunpack.c.l.s4 1966171168
      %v736 = vunpack.c.0.s8 %v735
      %v737 = vlaneseq
      %v738 = vshrl.u32 %v737, 7
      %v739 = vsub.s32 %v736, %v738
      %v740 = vrot.slane %v732, %v739
      %v741 = vcombine.high %v740, %v740
      %v743 = vunpack.c.l.s4 1966171168
      %v744 = vunpack.c.0.s8 %v743
      %v745 = vlaneseq
      %v746 = vshrl.u32 %v745, 7
      %v747 = vsub.s32 %v744, %v746
      %v748 = vrot.slane %v741, %v747
      %v750 = vmul.f32 %v730, %v748
      %v751 = vld [vmem:[%s3] sm:$0x1]
      %v752 = vmul.f32 %v724, %v750
      %v753 = vsub.f32 %v751, %v752
      %v755 = vlaneseq
      %v756 = vshrl.u32 %v755, 7
      %v757 = vsub.s32 0, %v756
      %v758 = vrot.slane %v750, %v757
      %759 = vrot.lane.b32.xlu0 %v758, 8
      %v760 = vpop.permute.xlu0 %759
      %762 = vrot.lane.b32.xlu0 %v758, 16
      %v763 = vpop.permute.xlu0 %762
      %765 = vrot.lane.b32.xlu0 %v758, 24
      %v766 = vpop.permute.xlu0 %765
      %768 = vrot.lane.b32.xlu0 %v758, 32
      %v769 = vpop.permute.xlu0 %768
      %771 = vrot.lane.b32.xlu0 %v758, 40
      %v772 = vpop.permute.xlu0 %771
      %774 = vrot.lane.b32.xlu0 %v758, 48
      %v775 = vpop.permute.xlu0 %774
      %777 = vrot.lane.b32.xlu0 %v758, 56
      %v778 = vpop.permute.xlu0 %777
      %780 = vrot.lane.b32.xlu0 %v758, 64
      %v781 = vpop.permute.xlu0 %780
      %783 = vrot.lane.b32.xlu0 %v758, 72
      %v784 = vpop.permute.xlu0 %783
      %786 = vrot.lane.b32.xlu0 %v758, 80
      %v787 = vpop.permute.xlu0 %786
      %789 = vrot.lane.b32.xlu0 %v758, 88
      %v790 = vpop.permute.xlu0 %789
      %792 = vrot.lane.b32.xlu0 %v758, 96
      %v793 = vpop.permute.xlu0 %792
      %795 = vrot.lane.b32.xlu0 %v758, 104
      %v796 = vpop.permute.xlu0 %795
      %798 = vrot.lane.b32.xlu0 %v758, 112
      %v799 = vpop.permute.xlu0 %798
      %801 = vrot.lane.b32.xlu0 %v758, 120
      %v802 = vpop.permute.xlu0 %801
      %vm804 = vcmask 64512
      %v805 = vsel %vm804, %v750, %v760
      %vm806 = vcmask 130048
      %v807 = vsel %vm806, %v805, %v763
      %vm808 = vcmask 195584
      %v809 = vsel %vm808, %v807, %v766
      %vm810 = vcmask 261120
      %v811 = vsel %vm810, %v809, %v769
      %vm812 = vcmask 326656
      %v813 = vsel %vm812, %v811, %v772
      %vm814 = vcmask 392192
      %v815 = vsel %vm814, %v813, %v775
      %vm816 = vcmask 457728
      %v817 = vsel %vm816, %v815, %v778
      %v818 = vsel %vm137, %v817, %v781
      %vm819 = vcmask 588800
      %v820 = vsel %vm819, %v818, %v784
      %vm821 = vcmask 654336
      %v822 = vsel %vm821, %v820, %v787
      %vm823 = vcmask 719872
      %v824 = vsel %vm823, %v822, %v790
      %vm825 = vcmask 785408
      %v826 = vsel %vm825, %v824, %v793
      %vm827 = vcmask 850944
      %v828 = vsel %vm827, %v826, %v796
      %vm829 = vcmask 916480
      %v830 = vsel %vm829, %v828, %v799
      %vm831 = vcmask 982016
      %v832 = vsel %vm831, %v830, %v802
      %v834 = vlaneseq
      %v835 = vshrl.u32 %v834, 7
      %v836 = vsub.s32 0, %v835
      %v837 = vrot.slane %v753, %v836
      %838 = vrot.lane.b32.xlu0 %v837, 8
      %v839 = vpop.permute.xlu0 %838
      %841 = vrot.lane.b32.xlu0 %v837, 16
      %v842 = vpop.permute.xlu0 %841
      %844 = vrot.lane.b32.xlu0 %v837, 24
      %v845 = vpop.permute.xlu0 %844
      %847 = vrot.lane.b32.xlu0 %v837, 32
      %v848 = vpop.permute.xlu0 %847
      %850 = vrot.lane.b32.xlu0 %v837, 40
      %v851 = vpop.permute.xlu0 %850
      %853 = vrot.lane.b32.xlu0 %v837, 48
      %v854 = vpop.permute.xlu0 %853
      %856 = vrot.lane.b32.xlu0 %v837, 56
      %v857 = vpop.permute.xlu0 %856
      %859 = vrot.lane.b32.xlu0 %v837, 64
      %v860 = vpop.permute.xlu0 %859
      %862 = vrot.lane.b32.xlu0 %v837, 72
      %v863 = vpop.permute.xlu0 %862
      %865 = vrot.lane.b32.xlu0 %v837, 80
      %v866 = vpop.permute.xlu0 %865
      %868 = vrot.lane.b32.xlu0 %v837, 88
      %v869 = vpop.permute.xlu0 %868
      %871 = vrot.lane.b32.xlu0 %v837, 96
      %v872 = vpop.permute.xlu0 %871
      %874 = vrot.lane.b32.xlu0 %v837, 104
      %v875 = vpop.permute.xlu0 %874
      %877 = vrot.lane.b32.xlu0 %v837, 112
      %v878 = vpop.permute.xlu0 %877
      %880 = vrot.lane.b32.xlu0 %v837, 120
      %v881 = vpop.permute.xlu0 %880
      %v883 = vsel %vm804, %v753, %v839
      %v884 = vsel %vm806, %v883, %v842
      %v885 = vsel %vm808, %v884, %v845
      %v886 = vsel %vm810, %v885, %v848
      %v887 = vsel %vm812, %v886, %v851
      %v888 = vsel %vm814, %v887, %v854
      %v889 = vsel %vm816, %v888, %v857
      %v890 = vsel %vm137, %v889, %v860
      %v891 = vsel %vm819, %v890, %v863
      %v892 = vsel %vm821, %v891, %v866
      %v893 = vsel %vm823, %v892, %v869
      %v894 = vsel %vm825, %v893, %v872
      %v895 = vsel %vm827, %v894, %v875
      %v896 = vsel %vm829, %v895, %v878
      %v897 = vsel %vm831, %v896, %v881
      %v898 = vld [vmem:[#allocation8] sm:$0xff]
      %v899 = vld [vmem:[#allocation8 + $0x8] sm:$0xff]
      %v900 = vld [vmem:[#allocation8 + $0x10] sm:$0xff]
      %v901 = vld [vmem:[#allocation8 + $0x18] sm:$0xff]
      %v902 = vld [vmem:[#allocation8 + $0x20] sm:$0xff]
      %v903 = vld [vmem:[#allocation8 + $0x28] sm:$0xff]
      %v904 = vld [vmem:[#allocation8 + $0x30] sm:$0xff]
      %v905 = vld [vmem:[#allocation8 + $0x38] sm:$0xff]
      %v906 = vlaneseq
      %v907 = vshrl.u32 %v906, 7
      %v908 = vsub.s32 0, %v907
      %v909 = vrot.slane %v832, %v908
      %v910 = vmul.f32 %v898, %v909
      %v911 = vmul.f32 %v899, %v909
      %v912 = vmul.f32 %v900, %v909
      %v913 = vmul.f32 %v901, %v909
      %v914 = vmul.f32 %v902, %v909
      %v915 = vmul.f32 %v903, %v909
      %v916 = vmul.f32 %v904, %v909
      %v917 = vmul.f32 %v905, %v909
      %v918 = vlaneseq
      %v919 = vshrl.u32 %v918, 7
      %v920 = vsub.s32 0, %v919
      %v921 = vrot.slane %v897, %v920
      %v922 = vadd.f32 %v910, %v921
      %v923 = vadd.f32 %v911, %v921
      %v924 = vadd.f32 %v912, %v921
      %v925 = vadd.f32 %v913, %v921
      %v926 = vadd.f32 %v914, %v921
      %v927 = vadd.f32 %v915, %v921
      %v928 = vadd.f32 %v916, %v921
      %v929 = vadd.f32 %v917, %v921
      %930 = vst [vmem:[#allocation8] sm:$0xff] %v922
      %931 = vst [vmem:[#allocation8 + $0x8] sm:$0xff] %v923
      %932 = vst [vmem:[#allocation8 + $0x10] sm:$0xff] %v924
      %933 = vst [vmem:[#allocation8 + $0x18] sm:$0xff] %v925
      %934 = vst [vmem:[#allocation8 + $0x20] sm:$0xff] %v926
      %935 = vst [vmem:[#allocation8 + $0x28] sm:$0xff] %v927
      %936 = vst [vmem:[#allocation8 + $0x30] sm:$0xff] %v928
      %937 = vst [vmem:[#allocation8 + $0x38] sm:$0xff] %v929
    $region33: #{tpu_custom_call.1} parent=1 // pred_fallthru
      _
    // Predicated region
    $region34: #{tpu_custom_call.1} parent=1 // pred_check
      _
    $region35: #{tpu_custom_call.1} parent=1 // pred_check_branch
      %939 = sbr.rel (0) target = $region37
    $region36: #{tpu_custom_call.1} parent=1 // pred_region
      %s941 = ssub.s32 1024, 1024
      %942 = vsyncadd [#allocation5], %s941
      %s943 = sshll.u32 [#allocation8], 4
      %s944 = int_to_ptr.vmem [resolvable:$true] %s943
      %949 = dma.vmem_to_hbm [thread:$0]  %s944, 1024, %s4, [#allocation5], 128, 128, 8
    $region37: #{tpu_custom_call.1} parent=1 // pred_fallthru
      _
    // Predicated region
    $region38: #{tpu_custom_call.1} parent=1 // pred_check
      _
    $region39: #{tpu_custom_call.1} parent=1 // pred_check_branch
      %951 = sbr.rel (0) target = $region41
    $region40: #{tpu_custom_call.1} parent=1 // pred_region
      %952 = dma.done [#allocation5], 1024
    $region41: #{tpu_custom_call.1} parent=1 // pred_fallthru
      _
    %953 = vsyncpa [#allocation4], 1
    %954 = vsyncpa [#allocation7], 1
    %955 = vsyncpa [#allocation5], 1

</llo_original>
